<compile_context>
chip_gen: v5e
topology: v5e:2x2
jax: 0.10.0
libtpu: 0.0.40
codegen_flags: <defaults>
</compile_context>

<pallas_src>
import functools

import jax
import jax.numpy as jnp
from jax.experimental import pallas as pl
from jax.experimental.pallas import tpu as pltpu


def _angle_loss_kernel(cos_ref, phi_ref, tgt_ref, scale_ref, out_ref, *, gamma):
    """Per-tile body: margin blend + log-softmax + focal term -> per-row loss."""
    cos = cos_ref[...].astype(jnp.float32)          # (T, C)
    phi = phi_ref[...].astype(jnp.float32)          # (T, C)
    tgt = tgt_ref[...]                              # (T, 1) int32
    scale = scale_ref[0]                            # f32 scalar in SMEM: 1/(1+lamb)

    t, c = cos.shape
    col = jax.lax.broadcasted_iota(jnp.int32, (t, c), 1)
    onehot = (col == tgt).astype(jnp.float32)       # (T, C) one-hot of target

    # output = cos_theta; at target index: cos - cos*scale + phi*scale
    output = cos + onehot * (scale * (phi - cos))

    # log-softmax value at the target class only:
    #   logpt = output[target] - max - log(sum(exp(output - max)))
    m = jnp.max(output, axis=1, keepdims=True)                       # (T, 1)
    out_t = jnp.sum(output * onehot, axis=1, keepdims=True)          # (T, 1)
    lse = jnp.log(jnp.sum(jnp.exp(output - m), axis=1, keepdims=True))
    logpt = out_t - m - lse                                          # (T, 1)

    if gamma:
        pt = jnp.exp(logpt)
        base = jnp.maximum(1.0 - pt, 0.0)           # clamp: avoid NaN for fractional gamma
        if float(gamma).is_integer() and gamma > 0:
            g = int(gamma)
            focal = base
            for _ in range(g - 1):                  # integer pow via repeated mul (VPU only)
                focal = focal * base
        else:
            focal = base ** gamma
        per_row = -focal * logpt
    else:
        per_row = -logpt                            # (1-pt)**0 == 1

    out_ref[...] = per_row                          # (T, 1) per-row losses for this tile


def angle_loss_pallas(cos_theta, phi_theta, target, scale, gamma=0, tile_rows=None):
    """Functional entry: returns mean AngleLoss over the batch."""
    n, c = cos_theta.shape
    itemsize = jnp.dtype(cos_theta.dtype).itemsize

    # --- choose batch tile size (block <= ~1.5 MiB per input; multiple of 8) ---
    if tile_rows is None:
        budget_bytes = 1536 * 1024
        max_rows = max(8, budget_bytes // max(1, c * itemsize))
        n_ceil8 = ((n + 7) // 8) * 8
        tile_rows = min(512, max_rows, n_ceil8)
    tile_rows = max(8, (int(tile_rows) // 8) * 8)

    num_tiles = -(-n // tile_rows)
    n_pad = num_tiles * tile_rows

    # --- pad batch dim so every block read is in-bounds ---
    tgt = target.reshape(-1).astype(jnp.int32)
    if n_pad != n:
        pad = n_pad - n
        cos_theta = jnp.pad(cos_theta, ((0, pad), (0, 0)))
        phi_theta = jnp.pad(phi_theta, ((0, pad), (0, 0)))
        tgt = jnp.pad(tgt, (0, pad))
    tgt = tgt.reshape(n_pad, 1)

    scale_arr = jnp.array([scale], dtype=jnp.float32)

    # --- VMEM budget & cost hints ---
    in_block = tile_rows * c * itemsize
    f32_block = tile_rows * c * 4
    vmem_estimate = 4 * in_block + 6 * f32_block + 4 * tile_rows * 128 * 4
    vmem_limit = int(min(max(vmem_estimate, 16 * 2**20), 60 * 2**20))

    cost = pl.CostEstimate(
        flops=int(12 * n_pad * c),
        transcendentals=int(n_pad * (c + 2)),
        bytes_accessed=int(2 * n_pad * c * itemsize + n_pad * 4 + n_pad * 4),
    )

    kernel = functools.partial(_angle_loss_kernel, gamma=gamma)

    per_row = pl.pallas_call(
        kernel,
        out_shape=jax.ShapeDtypeStruct((n_pad, 1), jnp.float32),
        grid=(num_tiles,),
        in_specs=[
            pl.BlockSpec((tile_rows, c), lambda i: (i, 0)),   # cos_theta block (VMEM)
            pl.BlockSpec((tile_rows, c), lambda i: (i, 0)),   # phi_theta block (VMEM)
            pl.BlockSpec((tile_rows, 1), lambda i: (i, 0)),   # target column (VMEM)
            pl.BlockSpec(memory_space=pltpu.MemorySpace.SMEM),  # scale scalar (SMEM)
        ],
        out_specs=pl.BlockSpec((tile_rows, 1), lambda i: (i, 0)),
        compiler_params=pltpu.CompilerParams(
            dimension_semantics=("parallel",),                # megacore sharding
            vmem_limit_bytes=vmem_limit,
        ),
        cost_estimate=cost,
    )(cos_theta, phi_theta, tgt, scale_arr)

    # Global mean: slice off padded rows, divide by the true batch size.
    return jnp.sum(per_row[:n, 0]) / n


class AngleLossPallas:
    """Stateful wrapper reproducing the PyTorch AngleLoss.forward semantics."""

    def __init__(self, gamma=0):
        self.gamma = gamma
        self.it = 0
        self.LambdaMin = 5.0
        self.LambdaMax = 1500.0
        self.lamb = 1500.0

    def __call__(self, inputs, target):
        self.it += 1
        cos_theta, phi_theta = inputs
        self.lamb = max(self.LambdaMin, self.LambdaMax / (1 + 0.1 * self.it))
        scale = 1.0 / (1.0 + self.lamb)             # host-side precompute
        return angle_loss_pallas(cos_theta, phi_theta, target, scale, self.gamma)


def _reference(cos_theta, phi_theta, target, lamb, gamma):
    cos_theta = cos_theta.astype(jnp.float32)
    phi_theta = phi_theta.astype(jnp.float32)
    c = cos_theta.shape[1]
    onehot = jax.nn.one_hot(target, c, dtype=jnp.float32)
    scale = 1.0 / (1.0 + lamb)
    output = cos_theta + onehot * (scale * (phi_theta - cos_theta))
    log_sm = jax.nn.log_softmax(output, axis=1)
    logpt = jnp.sum(log_sm * onehot, axis=1)
    pt = jnp.exp(logpt)
    loss = -((1.0 - pt) ** gamma) * logpt if gamma else -logpt
    return jnp.mean(loss)


if __name__ == "__main__":
    key = jax.random.PRNGKey(0)
    N, C = 8, 16  # batch, num_classes

    k1, k2, k3 = jax.random.split(key, 3)
    # cos_theta in [-1, 1]; phi_theta is the angular-margin variant (can be < -1)
    cos_theta = jnp.tanh(jax.random.normal(k1, (N, C), dtype=jnp.float32))
    phi_theta = cos_theta - jnp.abs(jax.random.normal(k2, (N, C), dtype=jnp.float32)) * 0.5
    target = jax.random.randint(k3, (N,), 0, C, dtype=jnp.int32)

    # ---- gamma = 0, float32 inputs ----
    loss_mod = AngleLossPallas(gamma=0)
    loss = jax.block_until_ready(loss_mod((cos_theta, phi_theta), target))
    ref = _reference(cos_theta, phi_theta, target, loss_mod.lamb, 0)
    assert jnp.allclose(loss, ref, rtol=1e-5, atol=1e-5), (loss, ref)

    # ---- gamma = 2 (focal branch), bf16 inputs (kernel upcasts internally) ----
    loss_mod2 = AngleLossPallas(gamma=2)
    cos_bf16 = cos_theta.astype(jnp.bfloat16)
    phi_bf16 = phi_theta.astype(jnp.bfloat16)
    loss2 = jax.block_until_ready(loss_mod2((cos_bf16, phi_bf16), target))
    ref2 = _reference(cos_bf16, phi_bf16, target, loss_mod2.lamb, 2)
    assert jnp.allclose(loss2, ref2, rtol=5e-3, atol=5e-3), (loss2, ref2)

    print("KERNEL_OK")
</pallas_src>

<mosaic_0001>
module attributes {stable_mosaic.version = 11 : i64} {
  func.func @_angle_loss_kernel(%arg0: i32, %arg1: memref<8x16xf32, #tpu.memory_space<vmem>>, %arg2: memref<8x16xf32, #tpu.memory_space<vmem>>, %arg3: memref<8x1xi32, #tpu.memory_space<vmem>>, %arg4: memref<1xf32, #tpu.memory_space<smem>>, %arg5: memref<8x1xf32, #tpu.memory_space<vmem>>) attributes {dimension_semantics = [#tpu.dimension_semantics<parallel>], iteration_bounds = array<i64: 1>, scalar_prefetch = 0 : i64, scratch_operands = 0 : i64, tpu.core_type = #tpu.core_type<tc>, window_params = [{transform_indices = @transform_0, window_bounds = array<i64: 8, 16>}, {transform_indices = @transform_1, window_bounds = array<i64: 8, 16>}, {transform_indices = @transform_2, window_bounds = array<i64: 8, 1>}, {transform_indices = @transform_3, window_bounds = array<i64: 1>}, {transform_indices = @transform_4, window_bounds = array<i64: 8, 1>}]} {
    %c0 = arith.constant 0 : index
    %c0_0 = arith.constant 0 : index
    %0 = vector.load %arg1[%c0, %c0_0] : memref<8x16xf32, #tpu.memory_space<vmem>>, vector<8x16xf32>
    %c0_1 = arith.constant 0 : index
    %c0_2 = arith.constant 0 : index
    %1 = vector.load %arg2[%c0_1, %c0_2] : memref<8x16xf32, #tpu.memory_space<vmem>>, vector<8x16xf32>
    %c0_3 = arith.constant 0 : index
    %c0_4 = arith.constant 0 : index
    %2 = vector.load %arg3[%c0_3, %c0_4] : memref<8x1xi32, #tpu.memory_space<vmem>>, vector<8x1xi32>
    %c0_5 = arith.constant 0 : index
    %3 = memref.load %arg4[%c0_5] : memref<1xf32, #tpu.memory_space<smem>>
    %4 = tpu.iota {dimensions = array<i32: 1>} : vector<8x16xi32>
    %5 = vector.broadcast %2 : vector<8x1xi32> to vector<8x16xi32>
    %6 = arith.cmpi eq, %4, %5 : vector<8x16xi32>
    %7 = arith.extui %6 : vector<8x16xi1> to vector<8x16xi32>
    %8 = arith.sitofp %7 : vector<8x16xi32> to vector<8x16xf32>
    %9 = arith.subf %1, %0 : vector<8x16xf32>
    %10 = vector.broadcast %3 : f32 to vector<8x16xf32>
    %11 = arith.mulf %10, %9 : vector<8x16xf32>
    %12 = arith.mulf %8, %11 : vector<8x16xf32>
    %13 = arith.addf %0, %12 : vector<8x16xf32>
    %cst = arith.constant dense<0xFF800000> : vector<8xf32>
    %14 = vector.multi_reduction <maximumf>, %13, %cst [1] : vector<8x16xf32> to vector<8xf32>
    %15 = vector.shape_cast %14 : vector<8xf32> to vector<8x1xf32>
    %16 = arith.mulf %13, %8 : vector<8x16xf32>
    %cst_6 = arith.constant dense<0.000000e+00> : vector<8xf32>
    %17 = vector.multi_reduction <add>, %16, %cst_6 [1] : vector<8x16xf32> to vector<8xf32>
    %18 = vector.shape_cast %17 : vector<8xf32> to vector<8x1xf32>
    %19 = vector.broadcast %15 : vector<8x1xf32> to vector<8x16xf32>
    %20 = arith.subf %13, %19 : vector<8x16xf32>
    %21 = math.exp %20 : vector<8x16xf32>
    %cst_7 = arith.constant dense<0.000000e+00> : vector<8xf32>
    %22 = vector.multi_reduction <add>, %21, %cst_7 [1] : vector<8x16xf32> to vector<8xf32>
    %23 = vector.shape_cast %22 : vector<8xf32> to vector<8x1xf32>
    %24 = math.log %23 : vector<8x1xf32>
    %25 = arith.subf %18, %15 : vector<8x1xf32>
    %26 = arith.subf %25, %24 : vector<8x1xf32>
    %cst_8 = arith.constant 0.000000e+00 : f32
    %27 = vector.broadcast %cst_8 : f32 to vector<8x1xf32>
    %28 = arith.subf %27, %26 : vector<8x1xf32>
    %c0_9 = arith.constant 0 : index
    %c0_10 = arith.constant 0 : index
    %29 = vector.load %arg5[%c0_9, %c0_10] : memref<8x1xf32, #tpu.memory_space<vmem>>, vector<8x1xf32>
    tpu.vector_store %arg5[%c0_9, %c0_10], %28 {strides = array<i32>} : memref<8x1xf32, #tpu.memory_space<vmem>>, vector<8x1xf32>,
    return
  }
  func.func @transform_0(%arg0: i32) -> (i32, i32) {
    %c0_i32 = arith.constant 0 : i32
    %c0_i32_0 = arith.constant 0 : i32
    return %arg0, %c0_i32 : i32, i32
  }
  func.func @transform_1(%arg0: i32) -> (i32, i32) {
    %c0_i32 = arith.constant 0 : i32
    %c0_i32_0 = arith.constant 0 : i32
    return %arg0, %c0_i32 : i32, i32
  }
  func.func @transform_2(%arg0: i32) -> (i32, i32) {
    %c0_i32 = arith.constant 0 : i32
    %c0_i32_0 = arith.constant 0 : i32
    return %arg0, %c0_i32 : i32, i32
  }
  func.func @transform_3(%arg0: i32) -> i32 {
    %c0_i32 = arith.constant 0 : i32
    %c0_i32_0 = arith.constant 0 : i32
    return %c0_i32 : i32
  }
  func.func @transform_4(%arg0: i32) -> (i32, i32) {
    %c0_i32 = arith.constant 0 : i32
    %c0_i32_0 = arith.constant 0 : i32
    return %arg0, %c0_i32 : i32, i32
  }
}

</mosaic_0001>

<llo_original>
// kernel: tpu_custom_call.1
$region0: #{tpu_custom_call.1}
  #allocation0 [shape = 'u32[]', space=smem, size = 0x4, offset = 0x4, fixed_abs, tag = 'smem constant byte address 0x4 - core index']
  #allocation1 [shape = 'u32[72,128]{1,0:T(1,128)}', space=vmem, size = 0x9000, scoped, tag = 'internal scratch']
  #allocation2 [shape = 'f32[1]{0:T(128)S(6)}', space=smem, size = 0x200, scoped, tag = 'scoped memory for tpu_custom_call.1']
  %s0 = inlined_call_operand.vmem [shape: f32[8,16], index: 0, kind: input, shape index: {}]
  %s1 = inlined_call_operand.hbm [shape: f32[8,16], index: 1, kind: input, shape index: {}]
  %s2 = inlined_call_operand.vmem [shape: s32[8,1], index: 2, kind: input, shape index: {}]
  %s3 = inlined_call_operand.<no memory space> [shape: f32[1], index: 3, kind: input, shape index: {}]
  %s4 = inlined_call_operand.vmem [shape: f32[8,1], index: 4, kind: output, shape index: {}]
  %s5 = sld [smem:[#allocation0]]
  $region30: #{tpu_custom_call.1} parent=0
    _
  %s7 = ssub.s32 1, %s5
  %s8 = scalar_select 0, %s7, %s5
  %9 = sst [smem:[#allocation2]] %s3
  $region1: #{tpu_custom_call.1} parent=0
    #allocation3 [shape = 'u8[4096]{0}', space=vmem, size = 0x1000, scoped, tag = 'input window, operand 1, single buffered']
    #allocation4 [shape = 's32[1]{0}', space=sflag, size = 0x4, scoped, tag = 'scoped memory for tpu_custom_call.1']
    %10 = vsyncpa [#allocation4], 0
    // Predicated region
    $region2: #{tpu_custom_call.1} parent=1 // pred_check
      _
    $region3: #{tpu_custom_call.1} parent=1 // pred_check_branch
      %12 = sbr.rel (0) target = $region5
    $region4: #{tpu_custom_call.1} parent=1 // pred_region
      _
    $region5: #{tpu_custom_call.1} parent=1 // pred_fallthru
      _
    // Predicated region
    $region6: #{tpu_custom_call.1} parent=1 // pred_check
      _
    $region7: #{tpu_custom_call.1} parent=1 // pred_check_branch
      %14 = sbr.rel (0) target = $region9
    $region8: #{tpu_custom_call.1} parent=1 // pred_region
      %16 = vsyncadd [#allocation4], 0
      %s18 = sshll.u32 %s1, 4
      %s19 = int_to_ptr.hbm [resolvable:$true] %s18
      %s20 = sshll.u32 [#allocation3], 4
      %s21 = int_to_ptr.vmem [resolvable:$true] %s20
      %23 = dma.hbm_to_vmem [thread:$0]  %s19, 128, %s21, [#allocation4]
    $region9: #{tpu_custom_call.1} parent=1 // pred_fallthru
      _
    // Predicated region
    $region10: #{tpu_custom_call.1} parent=1 // pred_check
      _
    $region11: #{tpu_custom_call.1} parent=1 // pred_check_branch
      %25 = sbr.rel (0) target = $region13
    $region12: #{tpu_custom_call.1} parent=1 // pred_region
      _
    $region13: #{tpu_custom_call.1} parent=1 // pred_fallthru
      _
    // Predicated region
    $region14: #{tpu_custom_call.1} parent=1 // pred_check
      _
    $region15: #{tpu_custom_call.1} parent=1 // pred_check_branch
      %27 = sbr.rel (0) target = $region17
    $region16: #{tpu_custom_call.1} parent=1 // pred_region
      _
    $region17: #{tpu_custom_call.1} parent=1 // pred_fallthru
      _
    // Predicated region
    $region18: #{tpu_custom_call.1} parent=1 // pred_check
      _
    $region19: #{tpu_custom_call.1} parent=1 // pred_check_branch
      %29 = sbr.rel (0) target = $region21
    $region20: #{tpu_custom_call.1} parent=1 // pred_region
      %31 = dma.done [#allocation4], 128
    $region21: #{tpu_custom_call.1} parent=1 // pred_fallthru
      _
    %v32 = vld [vmem:[%s0] sm:$0xff]
    %v33 = vld [vmem:[#allocation3] sm:$0xff]
    %v34 = vld [vmem:[%s2] sm:$0xff]
    %s35 = sld [smem:[#allocation2]]
    %v36 = vlaneseq
    %v37 = vand.u32 %v36, 127
    %38 = vset.pattern.permute.xlu0 0
    %39 = vperm.xlu0 %38, %v34
    %v40 = vpop.permute.xlu0 %39
    %vm41 = vcmp.eq.s32.totalorder %v37, %v40
    %v42 = vsel %vm41, 1, 0
    %v43 = vcvt.s32.f32 %v42
    %v44 = vsub.f32 %v33, %v32
    %v45 = vstv %s35
    %v46 = vmul.f32 %v45, %v44
    %v47 = vmul.f32 %v43, %v46
    %v48 = vadd.f32 %v32, %v47
    %vm49 = vcmask 130048
    %v50 = vsel %vm49, %v48, -inf
    %51 = vmax.xlane.f32.xlu0 %v50
    %v52 = vpop.xlane.xlu0 %51
    %v53 = vmul.f32 %v48, %v43
    %v54 = vsel %vm49, %v53, 0.0
    %55 = vadd.xlane.f32.xlu0 %v54
    %v56 = vpop.xlane.xlu0 %55
    %v57 = vsub.f32 %v48, %v52
    %v58 = vmul.f32 %v57, 1.442695
    %v59 = vpow.pop %v58
    %v60 = vsel %vm49, %v59, 0.0
    %61 = vadd.xlane.f32.xlu0 %v60
    %v62 = vpop.xlane.xlu0 %61
    %v63 = vlog2.pop %v62
    %v64 = vmul.f32 %v63, 0.6931472
    %v65 = vsub.f32 %v56, %v52
    %v66 = vsub.f32 %v65, %v64
    %v67 = vsub.f32 0.0, %v66
    %vm68 = vcmask 7168
    %69 = vst.msk [vmem:[%s4] sm:$0xff] %vm68, %v67
    // Predicated region
    $region22: #{tpu_custom_call.1} parent=1 // pred_check
      _
    $region23: #{tpu_custom_call.1} parent=1 // pred_check_branch
      %71 = sbr.rel (0) target = $region25
    $region24: #{tpu_custom_call.1} parent=1 // pred_region
      _
    $region25: #{tpu_custom_call.1} parent=1 // pred_fallthru
      _
    // Predicated region
    $region26: #{tpu_custom_call.1} parent=1 // pred_check
      _
    $region27: #{tpu_custom_call.1} parent=1 // pred_check_branch
      %73 = sbr.rel (0) target = $region29
    $region28: #{tpu_custom_call.1} parent=1 // pred_region
      _
    $region29: #{tpu_custom_call.1} parent=1 // pred_fallthru
      _
    %74 = vsyncpa [#allocation4], 1

</llo_original>
